<compile_context>
chip_gen: v6e
topology: v6e:2x2x1
jax: 0.10.0
libtpu: 0.0.40
codegen_flags: <defaults>
</compile_context>

<pallas_src>
import jax
import jax.numpy as jnp
from jax.experimental import pallas as pl
from jax.experimental.pallas import tpu as pltpu

INPUT_SIZE = 1
HIDDEN_SIZE = 32
OUTPUT_SIZE = 1
LANE = 128

# 32768 lanes per step: >=4x amortization of the ~0.35us/step overhead while
# the (HIDDEN, tile_b) f32 intermediate + double-buffered (8, tile_b)-padded
# x/out blocks stay well inside a 32 MiB scoped-VMEM budget (v5e included).
TILE_CAP = 32768


def _round_up(a, m):
    return ((a + m - 1) // m) * m


def _default_tile(batch):
    """Pick a lane-dense tile size (multiple of 128)."""
    b_cols = pl.cdiv(max(batch, 1), LANE)       # number of 128-lane columns
    if b_cols <= 1:
        return LANE
    if b_cols * LANE <= TILE_CAP:
        # Split into >=2 grid steps so the "parallel" axis can use both
        # TensorCores on v7x.
        return pl.cdiv(b_cols, 2) * LANE
    return TILE_CAP


def generator_kernel(x_ref, w1b1_ref, w2_ref, b2_ref, o_ref):
    # x_ref   : (1, tile_b)       batch on the lane axis (dense, unmasked vst)
    # w1b1_ref: (HIDDEN, 2)       packed constant block: columns [w1 | b1]
    # w2_ref  : (1, HIDDEN)       layer-2 weights as a lane-major row
    # b2_ref  : (1, 1)
    # o_ref   : (1, tile_b)
    x = x_ref[...].astype(jnp.float32)                         # (1, tile_b)
    w1_col = w1b1_ref[:, 0:1]                                  # (HIDDEN, 1)
    b1_col = w1b1_ref[:, 1:2]                                  # (HIDDEN, 1)

    # Layer 1: the w1*x outer product runs on the MXU; bias + ReLU on the VPU.
    h = jnp.dot(w1_col, x,
                preferred_element_type=jnp.float32,
                precision=jax.lax.Precision.HIGHEST)           # (HIDDEN, tile_b)
    h = jnp.maximum(h + b1_col, 0.0)

    # Layer 2: cross-sublane contraction on the MXU (replaces the VPU multiply
    # + XLU sublane reduction of the previous version); bias add on the VPU.
    y = jnp.dot(w2_ref[...], h,
                preferred_element_type=jnp.float32,
                precision=jax.lax.Precision.HIGHEST)           # (1, tile_b)
    o_ref[...] = (y + b2_ref[...]).astype(o_ref.dtype)


def generator_forward(x, w1, b1, w2, b2, *, tile_b=None):
    """x: (B, INPUT_SIZE) -> (B, OUTPUT_SIZE).

    w1: (INPUT_SIZE, HIDDEN_SIZE), b1: (1, HIDDEN_SIZE),
    w2: (HIDDEN_SIZE, OUTPUT_SIZE), b2: (1, OUTPUT_SIZE)
    """
    B = x.shape[0]
    if tile_b is None:
        tile_b = _default_tile(B)
    else:
        tile_b = max(LANE, _round_up(tile_b, LANE))
    grid = (pl.cdiv(B, tile_b),)

    # Layout plumbing only (no jnp.pad of the batch): batch onto the lane
    # axis; weights into MXU-friendly orientation; w1/b1 packed into one block.
    x_row = x.reshape(1, B)
    w1b1 = jnp.concatenate(
        [w1.reshape(HIDDEN_SIZE, 1), b1.reshape(HIDDEN_SIZE, 1)], axis=1
    ).astype(jnp.float32)                                      # (HIDDEN, 2)
    w2_row = w2.reshape(1, HIDDEN_SIZE).astype(jnp.float32)    # (1, HIDDEN)
    b2_s = b2.reshape(1, 1).astype(jnp.float32)

    # Advisory cost: compute-bound (VPU/MXU), ~8 B/elem of HBM traffic.
    cost = pl.CostEstimate(
        flops=(2 * HIDDEN_SIZE          # layer-1 outer product
               + 2 * HIDDEN_SIZE        # bias add + relu
               + 2 * HIDDEN_SIZE        # layer-2 contraction
               + 1) * B,
        transcendentals=0,
        bytes_accessed=8 * B + 4 * (3 * HIDDEN_SIZE + 1),
    )

    out_row = pl.pallas_call(
        generator_kernel,
        out_shape=jax.ShapeDtypeStruct((1, B), x.dtype),
        grid_spec=pltpu.PrefetchScalarGridSpec(
            num_scalar_prefetch=0,
            grid=grid,
            in_specs=[
                pl.BlockSpec((1, tile_b), lambda i: (0, i)),           # x (lane-dense)
                pl.BlockSpec((HIDDEN_SIZE, 2), lambda i: (0, 0)),      # [w1 | b1]
                pl.BlockSpec((1, HIDDEN_SIZE), lambda i: (0, 0)),      # w2 row
                pl.BlockSpec((1, 1), lambda i: (0, 0)),                # b2
            ],
            out_specs=pl.BlockSpec((1, tile_b), lambda i: (0, i)),     # lane-dense out
        ),
        compiler_params=pltpu.CompilerParams(
            dimension_semantics=("parallel",),
            vmem_limit_bytes=32 * 1024 * 1024,
        ),
        cost_estimate=cost,
    )(x_row, w1b1, w2_row, b2_s)

    return out_row.reshape(B, OUTPUT_SIZE)


def init_params(key):
    """Deterministic init mimicking PyTorch nn.Linear default:
    U(-1/sqrt(fan_in), 1/sqrt(fan_in)) for weights and biases."""
    k1, k2, k3, k4 = jax.random.split(key, 4)
    bound1 = 1.0 / jnp.sqrt(jnp.float32(INPUT_SIZE))
    bound2 = 1.0 / jnp.sqrt(jnp.float32(HIDDEN_SIZE))
    # stored transposed relative to torch: (in, out)
    w1 = jax.random.uniform(k1, (INPUT_SIZE, HIDDEN_SIZE), jnp.float32,
                            -bound1, bound1)
    b1 = jax.random.uniform(k2, (1, HIDDEN_SIZE), jnp.float32, -bound1, bound1)
    w2 = jax.random.uniform(k3, (HIDDEN_SIZE, OUTPUT_SIZE), jnp.float32,
                            -bound2, bound2)
    b2 = jax.random.uniform(k4, (1, OUTPUT_SIZE), jnp.float32, -bound2, bound2)
    return w1, b1, w2, b2


if __name__ == "__main__":
    key = jax.random.PRNGKey(0)
    k_params, k_x = jax.random.split(key)

    w1, b1, w2, b2 = init_params(k_params)

    # Small batch consistent with Generator(input_size=1, ...): x is (B, 1).
    B = 8
    x = jax.random.normal(k_x, (B, INPUT_SIZE), jnp.float32)

    out = jax.block_until_ready(generator_forward(x, w1, b1, w2, b2))

    # Reference check in plain JAX (same math as the PyTorch module).
    ref = jnp.maximum(x @ w1 + b1, 0.0) @ w2 + b2
    assert out.shape == (B, OUTPUT_SIZE)
    assert jnp.allclose(out, ref, atol=1e-5, rtol=1e-5)

    # Multi-tile ragged batch: grid > 1 with a partial last block (no padding).
    B2 = 300
    x2 = jax.random.normal(jax.random.PRNGKey(7), (B2, INPUT_SIZE), jnp.float32)
    out2 = jax.block_until_ready(generator_forward(x2, w1, b1, w2, b2, tile_b=128))
    ref2 = jnp.maximum(x2 @ w1 + b1, 0.0) @ w2 + b2
    assert out2.shape == (B2, OUTPUT_SIZE)
    assert jnp.allclose(out2, ref2, atol=1e-5, rtol=1e-5)

    # Larger batch exercising the default (large-tile, >=2-step) path.
    B3 = 1000
    x3 = jax.random.normal(jax.random.PRNGKey(11), (B3, INPUT_SIZE), jnp.float32)
    out3 = jax.block_until_ready(generator_forward(x3, w1, b1, w2, b2))
    ref3 = jnp.maximum(x3 @ w1 + b1, 0.0) @ w2 + b2
    assert out3.shape == (B3, OUTPUT_SIZE)
    assert jnp.allclose(out3, ref3, atol=1e-5, rtol=1e-5)

    print("KERNEL_OK")
</pallas_src>

<mosaic_0001>
module attributes {stable_mosaic.version = 11 : i64} {
  func.func @generator_kernel(%arg0: i32, %arg1: memref<1x128xf32, #tpu.memory_space<vmem>>, %arg2: memref<32x2xf32, #tpu.memory_space<vmem>>, %arg3: memref<1x32xf32, #tpu.memory_space<vmem>>, %arg4: memref<1x1xf32, #tpu.memory_space<vmem>>, %arg5: memref<1x128xf32, #tpu.memory_space<vmem>>) attributes {dimension_semantics = [#tpu.dimension_semantics<parallel>], iteration_bounds = array<i64: 1>, scalar_prefetch = 0 : i64, scratch_operands = 0 : i64, tpu.core_type = #tpu.core_type<tc>, window_params = [{transform_indices = @transform_0, window_bounds = array<i64: 1, 128>}, {pipeline_mode = #tpu.pipeline_mode<synchronous>, transform_indices = @transform_1, window_bounds = array<i64: 32, 2>}, {pipeline_mode = #tpu.pipeline_mode<synchronous>, transform_indices = @transform_2, window_bounds = array<i64: 1, 32>}, {pipeline_mode = #tpu.pipeline_mode<synchronous>, transform_indices = @transform_3, window_bounds = array<i64: 1, 1>}, {transform_indices = @transform_4, window_bounds = array<i64: 1, 128>}]} {
    %c0 = arith.constant 0 : index
    %c0_0 = arith.constant 0 : index
    %0 = vector.load %arg1[%c0, %c0_0] : memref<1x128xf32, #tpu.memory_space<vmem>>, vector<1x128xf32>
    %c0_1 = arith.constant 0 : index
    %c0_2 = arith.constant 0 : index
    %1 = vector.load %arg2[%c0_1, %c0_2] : memref<32x2xf32, #tpu.memory_space<vmem>>, vector<32x1xf32>
    %c0_3 = arith.constant 0 : index
    %c1 = arith.constant 1 : index
    %2 = vector.load %arg2[%c0_3, %c1] : memref<32x2xf32, #tpu.memory_space<vmem>>, vector<32x1xf32>
    %cst = arith.constant dense<0.000000e+00> : vector<32x128xf32>
    %3 = tpu.matmul %1, %0, %cst {dimension_numbers = #tpu.dot_dimension_numbers<[1], [0], [0], [1], [0, 0, 1, 1], [], []>, precision = #tpu.contract_precision<fp32>} : vector<32x1xf32>, vector<1x128xf32>, vector<32x128xf32> -> vector<32x128xf32>
    %4 = vector.broadcast %2 : vector<32x1xf32> to vector<32x128xf32>
    %5 = arith.addf %3, %4 : vector<32x128xf32>
    %cst_4 = arith.constant 0.000000e+00 : f32
    %6 = vector.broadcast %cst_4 : f32 to vector<32x128xf32>
    %7 = arith.maximumf %5, %6 : vector<32x128xf32>
    %c0_5 = arith.constant 0 : index
    %c0_6 = arith.constant 0 : index
    %8 = vector.load %arg3[%c0_5, %c0_6] : memref<1x32xf32, #tpu.memory_space<vmem>>, vector<1x32xf32>
    %cst_7 = arith.constant dense<0.000000e+00> : vector<1x128xf32>
    %9 = tpu.matmul %8, %7, %cst_7 {dimension_numbers = #tpu.dot_dimension_numbers<[1], [0], [0], [1], [0, 0, 1, 1], [], []>, precision = #tpu.contract_precision<fp32>} : vector<1x32xf32>, vector<32x128xf32>, vector<1x128xf32> -> vector<1x128xf32>
    %c0_8 = arith.constant 0 : index
    %c0_9 = arith.constant 0 : index
    %10 = vector.load %arg4[%c0_8, %c0_9] : memref<1x1xf32, #tpu.memory_space<vmem>>, vector<1x1xf32>
    %11 = vector.broadcast %10 : vector<1x1xf32> to vector<1x128xf32>
    %12 = arith.addf %9, %11 : vector<1x128xf32>
    %c0_10 = arith.constant 0 : index
    %c0_11 = arith.constant 0 : index
    %13 = vector.load %arg5[%c0_10, %c0_11] : memref<1x128xf32, #tpu.memory_space<vmem>>, vector<1x128xf32>
    tpu.vector_store %arg5[%c0_10, %c0_11], %12 {strides = array<i32>} : memref<1x128xf32, #tpu.memory_space<vmem>>, vector<1x128xf32>,
    return
  }
  func.func @transform_0(%arg0: i32) -> (i32, i32) {
    %c0_i32 = arith.constant 0 : i32
    %c0_i32_0 = arith.constant 0 : i32
    return %c0_i32, %arg0 : i32, i32
  }
  func.func @transform_1(%arg0: i32) -> (i32, i32) {
    %c0_i32 = arith.constant 0 : i32
    %c0_i32_0 = arith.constant 0 : i32
    %c0_i32_1 = arith.constant 0 : i32
    return %c0_i32, %c0_i32_0 : i32, i32
  }
  func.func @transform_2(%arg0: i32) -> (i32, i32) {
    %c0_i32 = arith.constant 0 : i32
    %c0_i32_0 = arith.constant 0 : i32
    %c0_i32_1 = arith.constant 0 : i32
    return %c0_i32, %c0_i32_0 : i32, i32
  }
  func.func @transform_3(%arg0: i32) -> (i32, i32) {
    %c0_i32 = arith.constant 0 : i32
    %c0_i32_0 = arith.constant 0 : i32
    %c0_i32_1 = arith.constant 0 : i32
    return %c0_i32, %c0_i32_0 : i32, i32
  }
  func.func @transform_4(%arg0: i32) -> (i32, i32) {
    %c0_i32 = arith.constant 0 : i32
    %c0_i32_0 = arith.constant 0 : i32
    return %c0_i32, %arg0 : i32, i32
  }
}

</mosaic_0001>

<llo_original>
// kernel: tpu_custom_call.1
$region0: #{tpu_custom_call.1}
  #allocation0 [shape = 'u32[]', space=smem, size = 0x4, offset = 0x4, fixed_abs, tag = 'smem constant byte address 0x4 - core index']
  #allocation1 [shape = 'u32[144,128]{1,0:T(1,128)}', space=vmem, size = 0x12000, scoped, tag = 'internal scratch']
  #allocation2 [shape = 'f32[1,1]{1,0:T(1,128)S(1)}', space=vmem, size = 0x200, scoped, tag = 'scoped memory for tpu_custom_call.1']
  %s0 = inlined_call_operand.vmem [shape: f32[1,8], index: 0, kind: input, shape index: {}]
  %s1 = inlined_call_operand.vmem [shape: f32[32,2], index: 1, kind: input, shape index: {}]
  %s2 = inlined_call_operand.vmem [shape: f32[1,32], index: 2, kind: input, shape index: {}]
  %s3 = inlined_call_operand.<no memory space> [shape: f32[1,1], index: 3, kind: input, shape index: {}]
  %s4 = inlined_call_operand.hbm [shape: f32[1,8], index: 4, kind: output, shape index: {}]
  %s5 = sld [smem:[#allocation0]]
  $region26: #{tpu_custom_call.1} parent=0
    _
  %s7 = ssub.s32 1, %s5
  %s8 = scalar_select 0, %s7, %s5
  %v9 = vstv %s3
  %10 = vst [vmem:[#allocation2] sm:$0x1] %v9
  $region1: #{tpu_custom_call.1} parent=0
    #allocation3 [shape = 'u8[512]{0}', space=vmem, size = 0x400, scoped, tag = 'output window, operand 0, single buffered']
    #allocation4 [shape = 's32[1]{0}', space=sflag, size = 0x4, scoped, tag = 'scoped memory for tpu_custom_call.1']
    %11 = vsyncpa [#allocation4], 0
    // Predicated region
    $region2: #{tpu_custom_call.1} parent=1 // pred_check
      _
    $region3: #{tpu_custom_call.1} parent=1 // pred_check_branch
      %13 = sbr.rel (0) target = $region5
    $region4: #{tpu_custom_call.1} parent=1 // pred_region
      _
    $region5: #{tpu_custom_call.1} parent=1 // pred_fallthru
      _
    // Predicated region
    $region6: #{tpu_custom_call.1} parent=1 // pred_check
      _
    $region7: #{tpu_custom_call.1} parent=1 // pred_check_branch
      %15 = sbr.rel (0) target = $region9
    $region8: #{tpu_custom_call.1} parent=1 // pred_region
      _
    $region9: #{tpu_custom_call.1} parent=1 // pred_fallthru
      _
    // Predicated region
    $region10: #{tpu_custom_call.1} parent=1 // pred_check
      _
    $region11: #{tpu_custom_call.1} parent=1 // pred_check_branch
      %17 = sbr.rel (0) target = $region13
    $region12: #{tpu_custom_call.1} parent=1 // pred_region
      _
    $region13: #{tpu_custom_call.1} parent=1 // pred_fallthru
      _
    // Predicated region
    $region14: #{tpu_custom_call.1} parent=1 // pred_check
      _
    $region15: #{tpu_custom_call.1} parent=1 // pred_check_branch
      %19 = sbr.rel (0) target = $region17
    $region16: #{tpu_custom_call.1} parent=1 // pred_region
      _
    $region17: #{tpu_custom_call.1} parent=1 // pred_fallthru
      _
    %v20 = vld [vmem:[%s0] sm:$0x1]
    %v21 = vld [vmem:[%s1] sm:$0xff]
    %v22 = vld [vmem:[%s1 + $0x8] sm:$0xff]
    %v23 = vld [vmem:[%s1 + $0x10] sm:$0xff]
    %v24 = vld [vmem:[%s1 + $0x18] sm:$0xff]
    %26 = vset.pattern.permute.xlu0 1
    %27 = vperm.xlu0 %26, %v21
    %v28 = vpop.permute.xlu0 %27
    %31 = vset.pattern.permute.xlu0 1
    %32 = vperm.xlu0 %31, %v22
    %v33 = vpop.permute.xlu0 %32
    %36 = vset.pattern.permute.xlu0 1
    %37 = vperm.xlu0 %36, %v23
    %v38 = vpop.permute.xlu0 %37
    %41 = vset.pattern.permute.xlu0 1
    %42 = vperm.xlu0 %41, %v24
    %v43 = vpop.permute.xlu0 %42
    %vm45 = vcmask 7168
    %v46 = vsel %vm45, %v21, 0
    %v48 = vsel %vm45, %v22, 0
    %v50 = vsel %vm45, %v23, 0
    %v52 = vsel %vm45, %v24, 0
    %vm54 = vcmask 1040384
    %v56 = vsel %vm54, %v20, 0
    %58 = vmatprep.subr.mxu0 0.0
    %59 = vmatpush1.msra.mxu0 0.0
    %60 = vmatprep.subr.mxu0 0.0
    %61 = vmatpush1.msra.mxu0 0.0
    %62 = vmatprep.subr.mxu0 0.0
    %63 = vmatpush1.msra.mxu0 0.0
    %64 = vmatprep.subr.mxu0 0.0
    %65 = vmatpush1.msra.mxu0 0.0
    %66 = vmatprep.subr.mxu0 0.0
    %67 = vmatpush1.msra.mxu0 0.0
    %68 = vmatprep.subr.mxu0 0.0
    %69 = vmatpush1.msra.mxu0 0.0
    %70 = vmatprep.subr.mxu0 0.0
    %71 = vmatpush1.msra.mxu0 0.0
    %72 = vmatprep.subr.mxu0 0.0
    %73 = vmatpush1.msra.mxu0 0.0
    %74 = vmatprep.subr.mxu0 0.0
    %75 = vmatpush1.msra.mxu0 0.0
    %76 = vmatprep.subr.mxu0 0.0
    %77 = vmatpush1.msra.mxu0 0.0
    %78 = vmatprep.subr.mxu0 0.0
    %79 = vmatpush1.msra.mxu0 0.0
    %80 = vmatprep.subr.mxu0 0.0
    %81 = vmatpush1.msra.mxu0 0.0
    %82 = vmatprep.subr.mxu0 0.0
    %83 = vmatpush1.msra.mxu0 0.0
    %84 = vmatprep.subr.mxu0 0.0
    %85 = vmatpush1.msra.mxu0 0.0
    %86 = vmatprep.subr.mxu0 0.0
    %87 = vmatpush1.msra.mxu0 0.0
    %88 = vmatprep.subr.mxu0 0.0
    %v89 = vand.u32 %v56, 4294901760
    %90 = vmatpush1.msra.mxu0 %v89
    %91 = vmatprep.subr.mxu0 0.0
    %92 = vmatpush2.msra.mxu0 0.0
    %93 = vmatprep.subr.mxu0 0.0
    %94 = vmatpush2.msra.mxu0 0.0
    %95 = vmatprep.subr.mxu0 0.0
    %96 = vmatpush2.msra.mxu0 0.0
    %97 = vmatprep.subr.mxu0 0.0
    %98 = vmatpush2.msra.mxu0 0.0
    %99 = vmatprep.subr.mxu0 0.0
    %100 = vmatpush2.msra.mxu0 0.0
    %101 = vmatprep.subr.mxu0 0.0
    %102 = vmatpush2.msra.mxu0 0.0
    %103 = vmatprep.subr.mxu0 0.0
    %104 = vmatpush2.msra.mxu0 0.0
    %105 = vmatprep.subr.mxu0 0.0
    %106 = vmatpush2.msra.mxu0 0.0
    %107 = vmatprep.subr.mxu0 0.0
    %108 = vmatpush2.msra.mxu0 0.0
    %109 = vmatprep.subr.mxu0 0.0
    %110 = vmatpush2.msra.mxu0 0.0
    %111 = vmatprep.subr.mxu0 0.0
    %112 = vmatpush2.msra.mxu0 0.0
    %113 = vmatprep.subr.mxu0 0.0
    %114 = vmatpush2.msra.mxu0 0.0
    %115 = vmatprep.subr.mxu0 0.0
    %116 = vmatpush2.msra.mxu0 0.0
    %117 = vmatprep.subr.mxu0 0.0
    %118 = vmatpush2.msra.mxu0 0.0
    %119 = vmatprep.subr.mxu0 0.0
    %120 = vmatpush2.msra.mxu0 0.0
    %121 = vmatprep.subr.mxu0 0.0
    %122 = vmatpush2.msra.mxu0 0.0
    %123 = vmatprep.mubr.f32.mxu0 0.0
    %v124 = vand.u32 %v46, 4294901760
    %v125 = vsub.f32 %v46, %v124
    %v126 = vand.u32 %v125, 4294901760
    %v127 = vsub.f32 %v125, %v126
    %v128 = vand.u32 %v127, 4294901760
    %129 = vmatmul.mubr.f32.gmra.mxu0 %v128
    %v130 = vpop.f32.mrf.mxu0
    %v131 = vadd.f32 %v28, %v130
    %v132 = vpop.f32.mrf.mxu0
    %133 = vmatprep.mubr.f32.mxu0 0.0
    %v134 = vand.u32 %v48, 4294901760
    %v135 = vsub.f32 %v48, %v134
    %v136 = vand.u32 %v135, 4294901760
    %v137 = vsub.f32 %v135, %v136
    %v138 = vand.u32 %v137, 4294901760
    %139 = vmatmul.mubr.f32.gmra.mxu0 %v138
    %v140 = vpop.f32.mrf.mxu0
    %v141 = vadd.f32 %v33, %v140
    %v142 = vpop.f32.mrf.mxu0
    %143 = vmatprep.mubr.f32.mxu0 0.0
    %v144 = vand.u32 %v50, 4294901760
    %v145 = vsub.f32 %v50, %v144
    %v146 = vand.u32 %v145, 4294901760
    %v147 = vsub.f32 %v145, %v146
    %v148 = vand.u32 %v147, 4294901760
    %149 = vmatmul.mubr.f32.gmra.mxu0 %v148
    %v150 = vpop.f32.mrf.mxu0
    %v151 = vadd.f32 %v38, %v150
    %v152 = vpop.f32.mrf.mxu0
    %153 = vmatprep.mubr.f32.mxu0 0.0
    %v154 = vand.u32 %v52, 4294901760
    %v155 = vsub.f32 %v52, %v154
    %v156 = vand.u32 %v155, 4294901760
    %v157 = vsub.f32 %v155, %v156
    %v158 = vand.u32 %v157, 4294901760
    %159 = vmatmul.mubr.f32.gmra.mxu0 %v158
    %v160 = vpop.f32.mrf.mxu0
    %v161 = vadd.f32 %v43, %v160
    %v162 = vpop.f32.mrf.mxu0
    %163 = vdwg.mxu0
    %164 = vmatprep.subr.mxu0 0.0
    %165 = vmatpush1.msra.mxu0 0.0
    %166 = vmatprep.subr.mxu0 0.0
    %167 = vmatpush1.msra.mxu0 0.0
    %168 = vmatprep.subr.mxu0 0.0
    %169 = vmatpush1.msra.mxu0 0.0
    %170 = vmatprep.subr.mxu0 0.0
    %171 = vmatpush1.msra.mxu0 0.0
    %172 = vmatprep.subr.mxu0 0.0
    %173 = vmatpush1.msra.mxu0 0.0
    %174 = vmatprep.subr.mxu0 0.0
    %175 = vmatpush1.msra.mxu0 0.0
    %176 = vmatprep.subr.mxu0 0.0
    %177 = vmatpush1.msra.mxu0 0.0
    %178 = vmatprep.subr.mxu0 0.0
    %179 = vmatpush1.msra.mxu0 0.0
    %180 = vmatprep.subr.mxu0 0.0
    %181 = vmatpush1.msra.mxu0 0.0
    %182 = vmatprep.subr.mxu0 0.0
    %183 = vmatpush1.msra.mxu0 0.0
    %184 = vmatprep.subr.mxu0 0.0
    %185 = vmatpush1.msra.mxu0 0.0
    %186 = vmatprep.subr.mxu0 0.0
    %187 = vmatpush1.msra.mxu0 0.0
    %188 = vmatprep.subr.mxu0 0.0
    %189 = vmatpush1.msra.mxu0 0.0
    %190 = vmatprep.subr.mxu0 0.0
    %191 = vmatpush1.msra.mxu0 0.0
    %192 = vmatprep.subr.mxu0 0.0
    %193 = vmatpush1.msra.mxu0 0.0
    %194 = vmatprep.subr.mxu0 0.0
    %v195 = vand.u32 %v56, 4294901760
    %v196 = vsub.f32 %v56, %v195
    %v197 = vand.u32 %v196, 4294901760
    %v198 = vsub.f32 %v196, %v197
    %v199 = vand.u32 %v198, 4294901760
    %200 = vmatpush1.msra.mxu0 %v199
    %201 = vmatprep.subr.mxu0 0.0
    %202 = vmatpush2.msra.mxu0 0.0
    %203 = vmatprep.subr.mxu0 0.0
    %204 = vmatpush2.msra.mxu0 0.0
    %205 = vmatprep.subr.mxu0 0.0
    %206 = vmatpush2.msra.mxu0 0.0
    %207 = vmatprep.subr.mxu0 0.0
    %208 = vmatpush2.msra.mxu0 0.0
    %209 = vmatprep.subr.mxu0 0.0
    %210 = vmatpush2.msra.mxu0 0.0
    %211 = vmatprep.subr.mxu0 0.0
    %212 = vmatpush2.msra.mxu0 0.0
    %213 = vmatprep.subr.mxu0 0.0
    %214 = vmatpush2.msra.mxu0 0.0
    %215 = vmatprep.subr.mxu0 0.0
    %216 = vmatpush2.msra.mxu0 0.0
    %217 = vmatprep.subr.mxu0 0.0
    %218 = vmatpush2.msra.mxu0 0.0
    %219 = vmatprep.subr.mxu0 0.0
    %220 = vmatpush2.msra.mxu0 0.0
    %221 = vmatprep.subr.mxu0 0.0
    %222 = vmatpush2.msra.mxu0 0.0
    %223 = vmatprep.subr.mxu0 0.0
    %224 = vmatpush2.msra.mxu0 0.0
    %225 = vmatprep.subr.mxu0 0.0
    %226 = vmatpush2.msra.mxu0 0.0
    %227 = vmatprep.subr.mxu0 0.0
    %228 = vmatpush2.msra.mxu0 0.0
    %229 = vmatprep.subr.mxu0 0.0
    %230 = vmatpush2.msra.mxu0 0.0
    %231 = vmatprep.subr.mxu0 0.0
    %232 = vmatpush2.msra.mxu0 0.0
    %233 = vmatprep.mubr.f32.mxu0 0.0
    %v234 = vand.u32 %v46, 4294901760
    %235 = vmatmul.mubr.f32.gmra.mxu0 %v234
    %v236 = vpop.f32.mrf.mxu0
    %v237 = vadd.f32 %v131, %v236
    %v238 = vpop.f32.mrf.mxu0
    %239 = vmatprep.mubr.f32.mxu0 0.0
    %v240 = vand.u32 %v48, 4294901760
    %241 = vmatmul.mubr.f32.gmra.mxu0 %v240
    %v242 = vpop.f32.mrf.mxu0
    %v243 = vadd.f32 %v141, %v242
    %v244 = vpop.f32.mrf.mxu0
    %245 = vmatprep.mubr.f32.mxu0 0.0
    %v246 = vand.u32 %v50, 4294901760
    %247 = vmatmul.mubr.f32.gmra.mxu0 %v246
    %v248 = vpop.f32.mrf.mxu0
    %v249 = vadd.f32 %v151, %v248
    %v250 = vpop.f32.mrf.mxu0
    %251 = vmatprep.mubr.f32.mxu0 0.0
    %v252 = vand.u32 %v52, 4294901760
    %253 = vmatmul.mubr.f32.gmra.mxu0 %v252
    %v254 = vpop.f32.mrf.mxu0
    %v255 = vadd.f32 %v161, %v254
    %v256 = vpop.f32.mrf.mxu0
    %257 = vdwg.mxu0
    %258 = vmatprep.subr.mxu0 0.0
    %259 = vmatpush1.msra.mxu0 0.0
    %260 = vmatprep.subr.mxu0 0.0
    %261 = vmatpush1.msra.mxu0 0.0
    %262 = vmatprep.subr.mxu0 0.0
    %263 = vmatpush1.msra.mxu0 0.0
    %264 = vmatprep.subr.mxu0 0.0
    %265 = vmatpush1.msra.mxu0 0.0
    %266 = vmatprep.subr.mxu0 0.0
    %267 = vmatpush1.msra.mxu0 0.0
    %268 = vmatprep.subr.mxu0 0.0
    %269 = vmatpush1.msra.mxu0 0.0
    %270 = vmatprep.subr.mxu0 0.0
    %271 = vmatpush1.msra.mxu0 0.0
    %272 = vmatprep.subr.mxu0 0.0
    %273 = vmatpush1.msra.mxu0 0.0
    %274 = vmatprep.subr.mxu0 0.0
    %275 = vmatpush1.msra.mxu0 0.0
    %276 = vmatprep.subr.mxu0 0.0
    %277 = vmatpush1.msra.mxu0 0.0
    %278 = vmatprep.subr.mxu0 0.0
    %279 = vmatpush1.msra.mxu0 0.0
    %280 = vmatprep.subr.mxu0 0.0
    %281 = vmatpush1.msra.mxu0 0.0
    %282 = vmatprep.subr.mxu0 0.0
    %283 = vmatpush1.msra.mxu0 0.0
    %284 = vmatprep.subr.mxu0 0.0
    %285 = vmatpush1.msra.mxu0 0.0
    %286 = vmatprep.subr.mxu0 0.0
    %287 = vmatpush1.msra.mxu0 0.0
    %288 = vmatprep.subr.mxu0 0.0
    %v289 = vand.u32 %v56, 4294901760
    %v290 = vsub.f32 %v56, %v289
    %291 = vmatpush1.msra.mxu0 %v290
    %292 = vmatprep.subr.mxu0 0.0
    %293 = vmatpush2.msra.mxu0 0.0
    %294 = vmatprep.subr.mxu0 0.0
    %295 = vmatpush2.msra.mxu0 0.0
    %296 = vmatprep.subr.mxu0 0.0
    %297 = vmatpush2.msra.mxu0 0.0
    %298 = vmatprep.subr.mxu0 0.0
    %299 = vmatpush2.msra.mxu0 0.0
    %300 = vmatprep.subr.mxu0 0.0
    %301 = vmatpush2.msra.mxu0 0.0
    %302 = vmatprep.subr.mxu0 0.0
    %303 = vmatpush2.msra.mxu0 0.0
    %304 = vmatprep.subr.mxu0 0.0
    %305 = vmatpush2.msra.mxu0 0.0
    %306 = vmatprep.subr.mxu0 0.0
    %307 = vmatpush2.msra.mxu0 0.0
    %308 = vmatprep.subr.mxu0 0.0
    %309 = vmatpush2.msra.mxu0 0.0
    %310 = vmatprep.subr.mxu0 0.0
    %311 = vmatpush2.msra.mxu0 0.0
    %312 = vmatprep.subr.mxu0 0.0
    %313 = vmatpush2.msra.mxu0 0.0
    %314 = vmatprep.subr.mxu0 0.0
    %315 = vmatpush2.msra.mxu0 0.0
    %316 = vmatprep.subr.mxu0 0.0
    %317 = vmatpush2.msra.mxu0 0.0
    %318 = vmatprep.subr.mxu0 0.0
    %319 = vmatpush2.msra.mxu0 0.0
    %320 = vmatprep.subr.mxu0 0.0
    %321 = vmatpush2.msra.mxu0 0.0
    %322 = vmatprep.subr.mxu0 0.0
    %323 = vmatpush2.msra.mxu0 0.0
    %324 = vmatprep.mubr.f32.mxu0 0.0
    %v325 = vand.u32 %v46, 4294901760
    %v326 = vsub.f32 %v46, %v325
    %327 = vmatmul.mubr.f32.gmra.mxu0 %v326
    %v328 = vpop.f32.mrf.mxu0
    %v329 = vadd.f32 %v237, %v328
    %v330 = vpop.f32.mrf.mxu0
    %331 = vmatprep.mubr.f32.mxu0 0.0
    %v332 = vand.u32 %v48, 4294901760
    %v333 = vsub.f32 %v48, %v332
    %334 = vmatmul.mubr.f32.gmra.mxu0 %v333
    %v335 = vpop.f32.mrf.mxu0
    %v336 = vadd.f32 %v243, %v335
    %v337 = vpop.f32.mrf.mxu0
    %338 = vmatprep.mubr.f32.mxu0 0.0
    %v339 = vand.u32 %v50, 4294901760
    %v340 = vsub.f32 %v50, %v339
    %341 = vmatmul.mubr.f32.gmra.mxu0 %v340
    %v342 = vpop.f32.mrf.mxu0
    %v343 = vadd.f32 %v249, %v342
    %v344 = vpop.f32.mrf.mxu0
    %345 = vmatprep.mubr.f32.mxu0 0.0
    %v346 = vand.u32 %v52, 4294901760
    %v347 = vsub.f32 %v52, %v346
    %348 = vmatmul.mubr.f32.gmra.mxu0 %v347
    %v349 = vpop.f32.mrf.mxu0
    %v350 = vadd.f32 %v255, %v349
    %v351 = vpop.f32.mrf.mxu0
    %352 = vdwg.mxu0
    %353 = vmatprep.subr.mxu0 0.0
    %354 = vmatpush1.msra.mxu0 0.0
    %355 = vmatprep.subr.mxu0 0.0
    %356 = vmatpush1.msra.mxu0 0.0
    %357 = vmatprep.subr.mxu0 0.0
    %358 = vmatpush1.msra.mxu0 0.0
    %359 = vmatprep.subr.mxu0 0.0
    %360 = vmatpush1.msra.mxu0 0.0
    %361 = vmatprep.subr.mxu0 0.0
    %362 = vmatpush1.msra.mxu0 0.0
    %363 = vmatprep.subr.mxu0 0.0
    %364 = vmatpush1.msra.mxu0 0.0
    %365 = vmatprep.subr.mxu0 0.0
    %366 = vmatpush1.msra.mxu0 0.0
    %367 = vmatprep.subr.mxu0 0.0
    %368 = vmatpush1.msra.mxu0 0.0
    %369 = vmatprep.subr.mxu0 0.0
    %370 = vmatpush1.msra.mxu0 0.0
    %371 = vmatprep.subr.mxu0 0.0
    %372 = vmatpush1.msra.mxu0 0.0
    %373 = vmatprep.subr.mxu0 0.0
    %374 = vmatpush1.msra.mxu0 0.0
    %375 = vmatprep.subr.mxu0 0.0
    %376 = vmatpush1.msra.mxu0 0.0
    %377 = vmatprep.subr.mxu0 0.0
    %378 = vmatpush1.msra.mxu0 0.0
    %379 = vmatprep.subr.mxu0 0.0
    %380 = vmatpush1.msra.mxu0 0.0
    %381 = vmatprep.subr.mxu0 0.0
    %382 = vmatpush1.msra.mxu0 0.0
    %383 = vmatprep.subr.mxu0 0.0
    %v384 = vand.u32 %v56, 4294901760
    %385 = vmatpush1.msra.mxu0 %v384
    %386 = vmatprep.subr.mxu0 0.0
    %387 = vmatpush2.msra.mxu0 0.0
    %388 = vmatprep.subr.mxu0 0.0
    %389 = vmatpush2.msra.mxu0 0.0
    %390 = vmatprep.subr.mxu0 0.0
    %391 = vmatpush2.msra.mxu0 0.0
    %392 = vmatprep.subr.mxu0 0.0
    %393 = vmatpush2.msra.mxu0 0.0
    %394 = vmatprep.subr.mxu0 0.0
    %395 = vmatpush2.msra.mxu0 0.0
    %396 = vmatprep.subr.mxu0 0.0
    %397 = vmatpush2.msra.mxu0 0.0
    %398 = vmatprep.subr.mxu0 0.0
    %399 = vmatpush2.msra.mxu0 0.0
    %400 = vmatprep.subr.mxu0 0.0
    %401 = vmatpush2.msra.mxu0 0.0
    %402 = vmatprep.subr.mxu0 0.0
    %403 = vmatpush2.msra.mxu0 0.0
    %404 = vmatprep.subr.mxu0 0.0
    %405 = vmatpush2.msra.mxu0 0.0
    %406 = vmatprep.subr.mxu0 0.0
    %407 = vmatpush2.msra.mxu0 0.0
    %408 = vmatprep.subr.mxu0 0.0
    %409 = vmatpush2.msra.mxu0 0.0
    %410 = vmatprep.subr.mxu0 0.0
    %411 = vmatpush2.msra.mxu0 0.0
    %412 = vmatprep.subr.mxu0 0.0
    %413 = vmatpush2.msra.mxu0 0.0
    %414 = vmatprep.subr.mxu0 0.0
    %415 = vmatpush2.msra.mxu0 0.0
    %416 = vmatprep.subr.mxu0 0.0
    %417 = vmatpush2.msra.mxu0 0.0
    %418 = vmatprep.mubr.f32.mxu0 0.0
    %v419 = vand.u32 %v46, 4294901760
    %v420 = vsub.f32 %v46, %v419
    %v421 = vand.u32 %v420, 4294901760
    %422 = vmatmul.mubr.f32.gmra.mxu0 %v421
    %v423 = vpop.f32.mrf.mxu0
    %v424 = vadd.f32 %v329, %v423
    %v425 = vpop.f32.mrf.mxu0
    %426 = vmatprep.mubr.f32.mxu0 0.0
    %v427 = vand.u32 %v48, 4294901760
    %v428 = vsub.f32 %v48, %v427
    %v429 = vand.u32 %v428, 4294901760
    %430 = vmatmul.mubr.f32.gmra.mxu0 %v429
    %v431 = vpop.f32.mrf.mxu0
    %v432 = vadd.f32 %v336, %v431
    %v433 = vpop.f32.mrf.mxu0
    %434 = vmatprep.mubr.f32.mxu0 0.0
    %v435 = vand.u32 %v50, 4294901760
    %v436 = vsub.f32 %v50, %v435
    %v437 = vand.u32 %v436, 4294901760
    %438 = vmatmul.mubr.f32.gmra.mxu0 %v437
    %v439 = vpop.f32.mrf.mxu0
    %v440 = vadd.f32 %v343, %v439
    %v441 = vpop.f32.mrf.mxu0
    %442 = vmatprep.mubr.f32.mxu0 0.0
    %v443 = vand.u32 %v52, 4294901760
    %v444 = vsub.f32 %v52, %v443
    %v445 = vand.u32 %v444, 4294901760
    %446 = vmatmul.mubr.f32.gmra.mxu0 %v445
    %v447 = vpop.f32.mrf.mxu0
    %v448 = vadd.f32 %v350, %v447
    %v449 = vpop.f32.mrf.mxu0
    %450 = vdwg.mxu0
    %451 = vmatprep.subr.mxu0 0.0
    %452 = vmatpush1.msra.mxu0 0.0
    %453 = vmatprep.subr.mxu0 0.0
    %454 = vmatpush1.msra.mxu0 0.0
    %455 = vmatprep.subr.mxu0 0.0
    %456 = vmatpush1.msra.mxu0 0.0
    %457 = vmatprep.subr.mxu0 0.0
    %458 = vmatpush1.msra.mxu0 0.0
    %459 = vmatprep.subr.mxu0 0.0
    %460 = vmatpush1.msra.mxu0 0.0
    %461 = vmatprep.subr.mxu0 0.0
    %462 = vmatpush1.msra.mxu0 0.0
    %463 = vmatprep.subr.mxu0 0.0
    %464 = vmatpush1.msra.mxu0 0.0
    %465 = vmatprep.subr.mxu0 0.0
    %466 = vmatpush1.msra.mxu0 0.0
    %467 = vmatprep.subr.mxu0 0.0
    %468 = vmatpush1.msra.mxu0 0.0
    %469 = vmatprep.subr.mxu0 0.0
    %470 = vmatpush1.msra.mxu0 0.0
    %471 = vmatprep.subr.mxu0 0.0
    %472 = vmatpush1.msra.mxu0 0.0
    %473 = vmatprep.subr.mxu0 0.0
    %474 = vmatpush1.msra.mxu0 0.0
    %475 = vmatprep.subr.mxu0 0.0
    %476 = vmatpush1.msra.mxu0 0.0
    %477 = vmatprep.subr.mxu0 0.0
    %478 = vmatpush1.msra.mxu0 0.0
    %479 = vmatprep.subr.mxu0 0.0
    %480 = vmatpush1.msra.mxu0 0.0
    %481 = vmatprep.subr.mxu0 0.0
    %v482 = vand.u32 %v56, 4294901760
    %v483 = vsub.f32 %v56, %v482
    %v484 = vand.u32 %v483, 4294901760
    %485 = vmatpush1.msra.mxu0 %v484
    %486 = vmatprep.subr.mxu0 0.0
    %487 = vmatpush2.msra.mxu0 0.0
    %488 = vmatprep.subr.mxu0 0.0
    %489 = vmatpush2.msra.mxu0 0.0
    %490 = vmatprep.subr.mxu0 0.0
    %491 = vmatpush2.msra.mxu0 0.0
    %492 = vmatprep.subr.mxu0 0.0
    %493 = vmatpush2.msra.mxu0 0.0
    %494 = vmatprep.subr.mxu0 0.0
    %495 = vmatpush2.msra.mxu0 0.0
    %496 = vmatprep.subr.mxu0 0.0
    %497 = vmatpush2.msra.mxu0 0.0
    %498 = vmatprep.subr.mxu0 0.0
    %499 = vmatpush2.msra.mxu0 0.0
    %500 = vmatprep.subr.mxu0 0.0
    %501 = vmatpush2.msra.mxu0 0.0
    %502 = vmatprep.subr.mxu0 0.0
    %503 = vmatpush2.msra.mxu0 0.0
    %504 = vmatprep.subr.mxu0 0.0
    %505 = vmatpush2.msra.mxu0 0.0
    %506 = vmatprep.subr.mxu0 0.0
    %507 = vmatpush2.msra.mxu0 0.0
    %508 = vmatprep.subr.mxu0 0.0
    %509 = vmatpush2.msra.mxu0 0.0
    %510 = vmatprep.subr.mxu0 0.0
    %511 = vmatpush2.msra.mxu0 0.0
    %512 = vmatprep.subr.mxu0 0.0
    %513 = vmatpush2.msra.mxu0 0.0
    %514 = vmatprep.subr.mxu0 0.0
    %515 = vmatpush2.msra.mxu0 0.0
    %516 = vmatprep.subr.mxu0 0.0
    %517 = vmatpush2.msra.mxu0 0.0
    %518 = vmatprep.mubr.f32.mxu0 0.0
    %v519 = vand.u32 %v46, 4294901760
    %520 = vmatmul.mubr.f32.gmra.mxu0 %v519
    %v521 = vpop.f32.mrf.mxu0
    %v522 = vadd.f32 %v424, %v521
    %v523 = vpop.f32.mrf.mxu0
    %524 = vmatprep.mubr.f32.mxu0 0.0
    %v525 = vand.u32 %v48, 4294901760
    %526 = vmatmul.mubr.f32.gmra.mxu0 %v525
    %v527 = vpop.f32.mrf.mxu0
    %v528 = vadd.f32 %v432, %v527
    %v529 = vpop.f32.mrf.mxu0
    %530 = vmatprep.mubr.f32.mxu0 0.0
    %v531 = vand.u32 %v50, 4294901760
    %532 = vmatmul.mubr.f32.gmra.mxu0 %v531
    %v533 = vpop.f32.mrf.mxu0
    %v534 = vadd.f32 %v440, %v533
    %v535 = vpop.f32.mrf.mxu0
    %536 = vmatprep.mubr.f32.mxu0 0.0
    %v537 = vand.u32 %v52, 4294901760
    %538 = vmatmul.mubr.f32.gmra.mxu0 %v537
    %v539 = vpop.f32.mrf.mxu0
    %v540 = vadd.f32 %v448, %v539
    %v541 = vpop.f32.mrf.mxu0
    %542 = vdwg.mxu0
    %543 = vmatprep.subr.mxu0 0.0
    %544 = vmatpush1.msra.mxu0 0.0
    %545 = vmatprep.subr.mxu0 0.0
    %546 = vmatpush1.msra.mxu0 0.0
    %547 = vmatprep.subr.mxu0 0.0
    %548 = vmatpush1.msra.mxu0 0.0
    %549 = vmatprep.subr.mxu0 0.0
    %550 = vmatpush1.msra.mxu0 0.0
    %551 = vmatprep.subr.mxu0 0.0
    %552 = vmatpush1.msra.mxu0 0.0
    %553 = vmatprep.subr.mxu0 0.0
    %554 = vmatpush1.msra.mxu0 0.0
    %555 = vmatprep.subr.mxu0 0.0
    %556 = vmatpush1.msra.mxu0 0.0
    %557 = vmatprep.subr.mxu0 0.0
    %558 = vmatpush1.msra.mxu0 0.0
    %559 = vmatprep.subr.mxu0 0.0
    %560 = vmatpush1.msra.mxu0 0.0
    %561 = vmatprep.subr.mxu0 0.0
    %562 = vmatpush1.msra.mxu0 0.0
    %563 = vmatprep.subr.mxu0 0.0
    %564 = vmatpush1.msra.mxu0 0.0
    %565 = vmatprep.subr.mxu0 0.0
    %566 = vmatpush1.msra.mxu0 0.0
    %567 = vmatprep.subr.mxu0 0.0
    %568 = vmatpush1.msra.mxu0 0.0
    %569 = vmatprep.subr.mxu0 0.0
    %570 = vmatpush1.msra.mxu0 0.0
    %571 = vmatprep.subr.mxu0 0.0
    %572 = vmatpush1.msra.mxu0 0.0
    %573 = vmatprep.subr.mxu0 0.0
    %v574 = vand.u32 %v56, 4294901760
    %575 = vmatpush1.msra.mxu0 %v574
    %576 = vmatprep.subr.mxu0 0.0
    %577 = vmatpush2.msra.mxu0 0.0
    %578 = vmatprep.subr.mxu0 0.0
    %579 = vmatpush2.msra.mxu0 0.0
    %580 = vmatprep.subr.mxu0 0.0
    %581 = vmatpush2.msra.mxu0 0.0
    %582 = vmatprep.subr.mxu0 0.0
    %583 = vmatpush2.msra.mxu0 0.0
    %584 = vmatprep.subr.mxu0 0.0
    %585 = vmatpush2.msra.mxu0 0.0
    %586 = vmatprep.subr.mxu0 0.0
    %587 = vmatpush2.msra.mxu0 0.0
    %588 = vmatprep.subr.mxu0 0.0
    %589 = vmatpush2.msra.mxu0 0.0
    %590 = vmatprep.subr.mxu0 0.0
    %591 = vmatpush2.msra.mxu0 0.0
    %592 = vmatprep.subr.mxu0 0.0
    %593 = vmatpush2.msra.mxu0 0.0
    %594 = vmatprep.subr.mxu0 0.0
    %595 = vmatpush2.msra.mxu0 0.0
    %596 = vmatprep.subr.mxu0 0.0
    %597 = vmatpush2.msra.mxu0 0.0
    %598 = vmatprep.subr.mxu0 0.0
    %599 = vmatpush2.msra.mxu0 0.0
    %600 = vmatprep.subr.mxu0 0.0
    %601 = vmatpush2.msra.mxu0 0.0
    %602 = vmatprep.subr.mxu0 0.0
    %603 = vmatpush2.msra.mxu0 0.0
    %604 = vmatprep.subr.mxu0 0.0
    %605 = vmatpush2.msra.mxu0 0.0
    %606 = vmatprep.subr.mxu0 0.0
    %607 = vmatpush2.msra.mxu0 0.0
    %608 = vmatprep.mubr.f32.mxu0 0.0
    %v609 = vand.u32 %v46, 4294901760
    %610 = vmatmul.mubr.f32.gmra.mxu0 %v609
    %v611 = vpop.f32.mrf.mxu0
    %v612 = vadd.f32 %v522, %v611
    %v613 = vpop.f32.mrf.mxu0
    %614 = vmatprep.mubr.f32.mxu0 0.0
    %v615 = vand.u32 %v48, 4294901760
    %616 = vmatmul.mubr.f32.gmra.mxu0 %v615
    %v617 = vpop.f32.mrf.mxu0
    %v618 = vadd.f32 %v528, %v617
    %v619 = vpop.f32.mrf.mxu0
    %620 = vmatprep.mubr.f32.mxu0 0.0
    %v621 = vand.u32 %v50, 4294901760
    %622 = vmatmul.mubr.f32.gmra.mxu0 %v621
    %v623 = vpop.f32.mrf.mxu0
    %v624 = vadd.f32 %v534, %v623
    %v625 = vpop.f32.mrf.mxu0
    %626 = vmatprep.mubr.f32.mxu0 0.0
    %v627 = vand.u32 %v52, 4294901760
    %628 = vmatmul.mubr.f32.gmra.mxu0 %v627
    %v629 = vpop.f32.mrf.mxu0
    %v630 = vadd.f32 %v540, %v629
    %v631 = vpop.f32.mrf.mxu0
    %632 = vdwg.mxu0
    %v633 = vmax.f32 %v612, 0.0
    %v634 = vmax.f32 %v618, 0.0
    %v635 = vmax.f32 %v624, 0.0
    %v636 = vmax.f32 %v630, 0.0
    %v637 = vld [vmem:[%s2] sm:$0x1]
    %v638 = vld [vmem:[#allocation2] sm:$0x1]
    %640 = vset.pattern.permute.xlu0 0
    %641 = vperm.xlu0 %640, %v638
    %v642 = vpop.permute.xlu0 %641
    %v644 = vlaneseq
    %v645 = vshrl.u32 %v644, 7
    %v646 = vsub.s32 0, %v645
    %v647 = vrot.slane %v642, %v646
    %vm648 = vcmask 261120
    %v650 = vsel %vm648, %v637, 0
    %652 = vmatprep.subr.mxu0 0.0
    %653 = vmatpush1.msra.mxu0 0.0
    %654 = vmatprep.subr.mxu0 0.0
    %655 = vmatpush1.msra.mxu0 0.0
    %656 = vmatprep.subr.mxu0 0.0
    %657 = vmatpush1.msra.mxu0 0.0
    %658 = vmatprep.subr.mxu0 0.0
    %659 = vmatpush1.msra.mxu0 0.0
    %660 = vmatprep.subr.mxu0 0.0
    %661 = vmatpush1.msra.mxu0 0.0
    %662 = vmatprep.subr.mxu0 0.0
    %663 = vmatpush1.msra.mxu0 0.0
    %664 = vmatprep.subr.mxu0 0.0
    %665 = vmatpush1.msra.mxu0 0.0
    %666 = vmatprep.subr.mxu0 0.0
    %667 = vmatpush1.msra.mxu0 0.0
    %668 = vmatprep.subr.mxu0 0.0
    %669 = vmatpush1.msra.mxu0 0.0
    %670 = vmatprep.subr.mxu0 0.0
    %671 = vmatpush1.msra.mxu0 0.0
    %672 = vmatprep.subr.mxu0 0.0
    %673 = vmatpush1.msra.mxu0 0.0
    %674 = vmatprep.subr.mxu0 0.0
    %675 = vmatpush1.msra.mxu0 0.0
    %676 = vmatprep.subr.mxu0 0.0
    %v677 = vand.u32 %v636, 4294901760
    %678 = vmatpush1.msra.mxu0 %v677
    %679 = vmatprep.subr.mxu0 0.0
    %v680 = vand.u32 %v635, 4294901760
    %681 = vmatpush1.msra.mxu0 %v680
    %682 = vmatprep.subr.mxu0 0.0
    %v683 = vand.u32 %v634, 4294901760
    %684 = vmatpush1.msra.mxu0 %v683
    %685 = vmatprep.subr.mxu0 0.0
    %v686 = vand.u32 %v633, 4294901760
    %687 = vmatpush1.msra.mxu0 %v686
    %688 = vmatprep.subr.mxu0 0.0
    %689 = vmatpush2.msra.mxu0 0.0
    %690 = vmatprep.subr.mxu0 0.0
    %691 = vmatpush2.msra.mxu0 0.0
    %692 = vmatprep.subr.mxu0 0.0
    %693 = vmatpush2.msra.mxu0 0.0
    %694 = vmatprep.subr.mxu0 0.0
    %695 = vmatpush2.msra.mxu0 0.0
    %696 = vmatprep.subr.mxu0 0.0
    %697 = vmatpush2.msra.mxu0 0.0
    %698 = vmatprep.subr.mxu0 0.0
    %699 = vmatpush2.msra.mxu0 0.0
    %700 = vmatprep.subr.mxu0 0.0
    %701 = vmatpush2.msra.mxu0 0.0
    %702 = vmatprep.subr.mxu0 0.0
    %703 = vmatpush2.msra.mxu0 0.0
    %704 = vmatprep.subr.mxu0 0.0
    %705 = vmatpush2.msra.mxu0 0.0
    %706 = vmatprep.subr.mxu0 0.0
    %707 = vmatpush2.msra.mxu0 0.0
    %708 = vmatprep.subr.mxu0 0.0
    %709 = vmatpush2.msra.mxu0 0.0
    %710 = vmatprep.subr.mxu0 0.0
    %711 = vmatpush2.msra.mxu0 0.0
    %712 = vmatprep.subr.mxu0 0.0
    %713 = vmatpush2.msra.mxu0 0.0
    %714 = vmatprep.subr.mxu0 0.0
    %715 = vmatpush2.msra.mxu0 0.0
    %716 = vmatprep.subr.mxu0 0.0
    %717 = vmatpush2.msra.mxu0 0.0
    %718 = vmatprep.subr.mxu0 0.0
    %719 = vmatpush2.msra.mxu0 0.0
    %720 = vmatprep.mubr.f32.mxu0 0.0
    %v721 = vand.u32 %v650, 4294901760
    %v722 = vsub.f32 %v650, %v721
    %v723 = vand.u32 %v722, 4294901760
    %v724 = vsub.f32 %v722, %v723
    %v725 = vand.u32 %v724, 4294901760
    %726 = vmatmul.mubr.f32.gmra.mxu0 %v725
    %v727 = vpop.f32.mrf.mxu0
    %v728 = vadd.f32 %v647, %v727
    %v729 = vpop.f32.mrf.mxu0
    %730 = vdwg.mxu0
    %731 = vmatprep.subr.mxu0 0.0
    %732 = vmatpush1.msra.mxu0 0.0
    %733 = vmatprep.subr.mxu0 0.0
    %734 = vmatpush1.msra.mxu0 0.0
    %735 = vmatprep.subr.mxu0 0.0
    %736 = vmatpush1.msra.mxu0 0.0
    %737 = vmatprep.subr.mxu0 0.0
    %738 = vmatpush1.msra.mxu0 0.0
    %739 = vmatprep.subr.mxu0 0.0
    %740 = vmatpush1.msra.mxu0 0.0
    %741 = vmatprep.subr.mxu0 0.0
    %742 = vmatpush1.msra.mxu0 0.0
    %743 = vmatprep.subr.mxu0 0.0
    %744 = vmatpush1.msra.mxu0 0.0
    %745 = vmatprep.subr.mxu0 0.0
    %746 = vmatpush1.msra.mxu0 0.0
    %747 = vmatprep.subr.mxu0 0.0
    %748 = vmatpush1.msra.mxu0 0.0
    %749 = vmatprep.subr.mxu0 0.0
    %750 = vmatpush1.msra.mxu0 0.0
    %751 = vmatprep.subr.mxu0 0.0
    %752 = vmatpush1.msra.mxu0 0.0
    %753 = vmatprep.subr.mxu0 0.0
    %754 = vmatpush1.msra.mxu0 0.0
    %755 = vmatprep.subr.mxu0 0.0
    %v756 = vand.u32 %v636, 4294901760
    %v757 = vsub.f32 %v636, %v756
    %v758 = vand.u32 %v757, 4294901760
    %v759 = vsub.f32 %v757, %v758
    %v760 = vand.u32 %v759, 4294901760
    %761 = vmatpush1.msra.mxu0 %v760
    %762 = vmatprep.subr.mxu0 0.0
    %v763 = vand.u32 %v635, 4294901760
    %v764 = vsub.f32 %v635, %v763
    %v765 = vand.u32 %v764, 4294901760
    %v766 = vsub.f32 %v764, %v765
    %v767 = vand.u32 %v766, 4294901760
    %768 = vmatpush1.msra.mxu0 %v767
    %769 = vmatprep.subr.mxu0 0.0
    %v770 = vand.u32 %v634, 4294901760
    %v771 = vsub.f32 %v634, %v770
    %v772 = vand.u32 %v771, 4294901760
    %v773 = vsub.f32 %v771, %v772
    %v774 = vand.u32 %v773, 4294901760
    %775 = vmatpush1.msra.mxu0 %v774
    %776 = vmatprep.subr.mxu0 0.0
    %v777 = vand.u32 %v633, 4294901760
    %v778 = vsub.f32 %v633, %v777
    %v779 = vand.u32 %v778, 4294901760
    %v780 = vsub.f32 %v778, %v779
    %v781 = vand.u32 %v780, 4294901760
    %782 = vmatpush1.msra.mxu0 %v781
    %783 = vmatprep.subr.mxu0 0.0
    %784 = vmatpush2.msra.mxu0 0.0
    %785 = vmatprep.subr.mxu0 0.0
    %786 = vmatpush2.msra.mxu0 0.0
    %787 = vmatprep.subr.mxu0 0.0
    %788 = vmatpush2.msra.mxu0 0.0
    %789 = vmatprep.subr.mxu0 0.0
    %790 = vmatpush2.msra.mxu0 0.0
    %791 = vmatprep.subr.mxu0 0.0
    %792 = vmatpush2.msra.mxu0 0.0
    %793 = vmatprep.subr.mxu0 0.0
    %794 = vmatpush2.msra.mxu0 0.0
    %795 = vmatprep.subr.mxu0 0.0
    %796 = vmatpush2.msra.mxu0 0.0
    %797 = vmatprep.subr.mxu0 0.0
    %798 = vmatpush2.msra.mxu0 0.0
    %799 = vmatprep.subr.mxu0 0.0
    %800 = vmatpush2.msra.mxu0 0.0
    %801 = vmatprep.subr.mxu0 0.0
    %802 = vmatpush2.msra.mxu0 0.0
    %803 = vmatprep.subr.mxu0 0.0
    %804 = vmatpush2.msra.mxu0 0.0
    %805 = vmatprep.subr.mxu0 0.0
    %806 = vmatpush2.msra.mxu0 0.0
    %807 = vmatprep.subr.mxu0 0.0
    %808 = vmatpush2.msra.mxu0 0.0
    %809 = vmatprep.subr.mxu0 0.0
    %810 = vmatpush2.msra.mxu0 0.0
    %811 = vmatprep.subr.mxu0 0.0
    %812 = vmatpush2.msra.mxu0 0.0
    %813 = vmatprep.subr.mxu0 0.0
    %814 = vmatpush2.msra.mxu0 0.0
    %815 = vmatprep.mubr.f32.mxu0 0.0
    %v816 = vand.u32 %v650, 4294901760
    %817 = vmatmul.mubr.f32.gmra.mxu0 %v816
    %v818 = vpop.f32.mrf.mxu0
    %v819 = vadd.f32 %v728, %v818
    %v820 = vpop.f32.mrf.mxu0
    %821 = vdwg.mxu0
    %822 = vmatprep.subr.mxu0 0.0
    %823 = vmatpush1.msra.mxu0 0.0
    %824 = vmatprep.subr.mxu0 0.0
    %825 = vmatpush1.msra.mxu0 0.0
    %826 = vmatprep.subr.mxu0 0.0
    %827 = vmatpush1.msra.mxu0 0.0
    %828 = vmatprep.subr.mxu0 0.0
    %829 = vmatpush1.msra.mxu0 0.0
    %830 = vmatprep.subr.mxu0 0.0
    %831 = vmatpush1.msra.mxu0 0.0
    %832 = vmatprep.subr.mxu0 0.0
    %833 = vmatpush1.msra.mxu0 0.0
    %834 = vmatprep.subr.mxu0 0.0
    %835 = vmatpush1.msra.mxu0 0.0
    %836 = vmatprep.subr.mxu0 0.0
    %837 = vmatpush1.msra.mxu0 0.0
    %838 = vmatprep.subr.mxu0 0.0
    %839 = vmatpush1.msra.mxu0 0.0
    %840 = vmatprep.subr.mxu0 0.0
    %841 = vmatpush1.msra.mxu0 0.0
    %842 = vmatprep.subr.mxu0 0.0
    %843 = vmatpush1.msra.mxu0 0.0
    %844 = vmatprep.subr.mxu0 0.0
    %845 = vmatpush1.msra.mxu0 0.0
    %846 = vmatprep.subr.mxu0 0.0
    %v847 = vand.u32 %v636, 4294901760
    %v848 = vsub.f32 %v636, %v847
    %849 = vmatpush1.msra.mxu0 %v848
    %850 = vmatprep.subr.mxu0 0.0
    %v851 = vand.u32 %v635, 4294901760
    %v852 = vsub.f32 %v635, %v851
    %853 = vmatpush1.msra.mxu0 %v852
    %854 = vmatprep.subr.mxu0 0.0
    %v855 = vand.u32 %v634, 4294901760
    %v856 = vsub.f32 %v634, %v855
    %857 = vmatpush1.msra.mxu0 %v856
    %858 = vmatprep.subr.mxu0 0.0
    %v859 = vand.u32 %v633, 4294901760
    %v860 = vsub.f32 %v633, %v859
    %861 = vmatpush1.msra.mxu0 %v860
    %862 = vmatprep.subr.mxu0 0.0
    %863 = vmatpush2.msra.mxu0 0.0
    %864 = vmatprep.subr.mxu0 0.0
    %865 = vmatpush2.msra.mxu0 0.0
    %866 = vmatprep.subr.mxu0 0.0
    %867 = vmatpush2.msra.mxu0 0.0
    %868 = vmatprep.subr.mxu0 0.0
    %869 = vmatpush2.msra.mxu0 0.0
    %870 = vmatprep.subr.mxu0 0.0
    %871 = vmatpush2.msra.mxu0 0.0
    %872 = vmatprep.subr.mxu0 0.0
    %873 = vmatpush2.msra.mxu0 0.0
    %874 = vmatprep.subr.mxu0 0.0
    %875 = vmatpush2.msra.mxu0 0.0
    %876 = vmatprep.subr.mxu0 0.0
    %877 = vmatpush2.msra.mxu0 0.0
    %878 = vmatprep.subr.mxu0 0.0
    %879 = vmatpush2.msra.mxu0 0.0
    %880 = vmatprep.subr.mxu0 0.0
    %881 = vmatpush2.msra.mxu0 0.0
    %882 = vmatprep.subr.mxu0 0.0
    %883 = vmatpush2.msra.mxu0 0.0
    %884 = vmatprep.subr.mxu0 0.0
    %885 = vmatpush2.msra.mxu0 0.0
    %886 = vmatprep.subr.mxu0 0.0
    %887 = vmatpush2.msra.mxu0 0.0
    %888 = vmatprep.subr.mxu0 0.0
    %889 = vmatpush2.msra.mxu0 0.0
    %890 = vmatprep.subr.mxu0 0.0
    %891 = vmatpush2.msra.mxu0 0.0
    %892 = vmatprep.subr.mxu0 0.0
    %893 = vmatpush2.msra.mxu0 0.0
    %894 = vmatprep.mubr.f32.mxu0 0.0
    %v895 = vand.u32 %v650, 4294901760
    %v896 = vsub.f32 %v650, %v895
    %897 = vmatmul.mubr.f32.gmra.mxu0 %v896
    %v898 = vpop.f32.mrf.mxu0
    %v899 = vadd.f32 %v819, %v898
    %v900 = vpop.f32.mrf.mxu0
    %901 = vdwg.mxu0
    %902 = vmatprep.subr.mxu0 0.0
    %903 = vmatpush1.msra.mxu0 0.0
    %904 = vmatprep.subr.mxu0 0.0
    %905 = vmatpush1.msra.mxu0 0.0
    %906 = vmatprep.subr.mxu0 0.0
    %907 = vmatpush1.msra.mxu0 0.0
    %908 = vmatprep.subr.mxu0 0.0
    %909 = vmatpush1.msra.mxu0 0.0
    %910 = vmatprep.subr.mxu0 0.0
    %911 = vmatpush1.msra.mxu0 0.0
    %912 = vmatprep.subr.mxu0 0.0
    %913 = vmatpush1.msra.mxu0 0.0
    %914 = vmatprep.subr.mxu0 0.0
    %915 = vmatpush1.msra.mxu0 0.0
    %916 = vmatprep.subr.mxu0 0.0
    %917 = vmatpush1.msra.mxu0 0.0
    %918 = vmatprep.subr.mxu0 0.0
    %919 = vmatpush1.msra.mxu0 0.0
    %920 = vmatprep.subr.mxu0 0.0
    %921 = vmatpush1.msra.mxu0 0.0
    %922 = vmatprep.subr.mxu0 0.0
    %923 = vmatpush1.msra.mxu0 0.0
    %924 = vmatprep.subr.mxu0 0.0
    %925 = vmatpush1.msra.mxu0 0.0
    %926 = vmatprep.subr.mxu0 0.0
    %v927 = vand.u32 %v636, 4294901760
    %928 = vmatpush1.msra.mxu0 %v927
    %929 = vmatprep.subr.mxu0 0.0
    %v930 = vand.u32 %v635, 4294901760
    %931 = vmatpush1.msra.mxu0 %v930
    %932 = vmatprep.subr.mxu0 0.0
    %v933 = vand.u32 %v634, 4294901760
    %934 = vmatpush1.msra.mxu0 %v933
    %935 = vmatprep.subr.mxu0 0.0
    %v936 = vand.u32 %v633, 4294901760
    %937 = vmatpush1.msra.mxu0 %v936
    %938 = vmatprep.subr.mxu0 0.0
    %939 = vmatpush2.msra.mxu0 0.0
    %940 = vmatprep.subr.mxu0 0.0
    %941 = vmatpush2.msra.mxu0 0.0
    %942 = vmatprep.subr.mxu0 0.0
    %943 = vmatpush2.msra.mxu0 0.0
    %944 = vmatprep.subr.mxu0 0.0
    %945 = vmatpush2.msra.mxu0 0.0
    %946 = vmatprep.subr.mxu0 0.0
    %947 = vmatpush2.msra.mxu0 0.0
    %948 = vmatprep.subr.mxu0 0.0
    %949 = vmatpush2.msra.mxu0 0.0
    %950 = vmatprep.subr.mxu0 0.0
    %951 = vmatpush2.msra.mxu0 0.0
    %952 = vmatprep.subr.mxu0 0.0
    %953 = vmatpush2.msra.mxu0 0.0
    %954 = vmatprep.subr.mxu0 0.0
    %955 = vmatpush2.msra.mxu0 0.0
    %956 = vmatprep.subr.mxu0 0.0
    %957 = vmatpush2.msra.mxu0 0.0
    %958 = vmatprep.subr.mxu0 0.0
    %959 = vmatpush2.msra.mxu0 0.0
    %960 = vmatprep.subr.mxu0 0.0
    %961 = vmatpush2.msra.mxu0 0.0
    %962 = vmatprep.subr.mxu0 0.0
    %963 = vmatpush2.msra.mxu0 0.0
    %964 = vmatprep.subr.mxu0 0.0
    %965 = vmatpush2.msra.mxu0 0.0
    %966 = vmatprep.subr.mxu0 0.0
    %967 = vmatpush2.msra.mxu0 0.0
    %968 = vmatprep.subr.mxu0 0.0
    %969 = vmatpush2.msra.mxu0 0.0
    %970 = vmatprep.mubr.f32.mxu0 0.0
    %v971 = vand.u32 %v650, 4294901760
    %v972 = vsub.f32 %v650, %v971
    %v973 = vand.u32 %v972, 4294901760
    %974 = vmatmul.mubr.f32.gmra.mxu0 %v973
    %v975 = vpop.f32.mrf.mxu0
    %v976 = vadd.f32 %v899, %v975
    %v977 = vpop.f32.mrf.mxu0
    %978 = vdwg.mxu0
    %979 = vmatprep.subr.mxu0 0.0
    %980 = vmatpush1.msra.mxu0 0.0
    %981 = vmatprep.subr.mxu0 0.0
    %982 = vmatpush1.msra.mxu0 0.0
    %983 = vmatprep.subr.mxu0 0.0
    %984 = vmatpush1.msra.mxu0 0.0
    %985 = vmatprep.subr.mxu0 0.0
    %986 = vmatpush1.msra.mxu0 0.0
    %987 = vmatprep.subr.mxu0 0.0
    %988 = vmatpush1.msra.mxu0 0.0
    %989 = vmatprep.subr.mxu0 0.0
    %990 = vmatpush1.msra.mxu0 0.0
    %991 = vmatprep.subr.mxu0 0.0
    %992 = vmatpush1.msra.mxu0 0.0
    %993 = vmatprep.subr.mxu0 0.0
    %994 = vmatpush1.msra.mxu0 0.0
    %995 = vmatprep.subr.mxu0 0.0
    %996 = vmatpush1.msra.mxu0 0.0
    %997 = vmatprep.subr.mxu0 0.0
    %998 = vmatpush1.msra.mxu0 0.0
    %999 = vmatprep.subr.mxu0 0.0
    %1000 = vmatpush1.msra.mxu0 0.0
    %1001 = vmatprep.subr.mxu0 0.0
    %1002 = vmatpush1.msra.mxu0 0.0
    %1003 = vmatprep.subr.mxu0 0.0
    %v1004 = vand.u32 %v636, 4294901760
    %v1005 = vsub.f32 %v636, %v1004
    %v1006 = vand.u32 %v1005, 4294901760
    %1007 = vmatpush1.msra.mxu0 %v1006
    %1008 = vmatprep.subr.mxu0 0.0
    %v1009 = vand.u32 %v635, 4294901760
    %v1010 = vsub.f32 %v635, %v1009
    %v1011 = vand.u32 %v1010, 4294901760
    %1012 = vmatpush1.msra.mxu0 %v1011
    %1013 = vmatprep.subr.mxu0 0.0
    %v1014 = vand.u32 %v634, 4294901760
    %v1015 = vsub.f32 %v634, %v1014
    %v1016 = vand.u32 %v1015, 4294901760
    %1017 = vmatpush1.msra.mxu0 %v1016
    %1018 = vmatprep.subr.mxu0 0.0
    %v1019 = vand.u32 %v633, 4294901760
    %v1020 = vsub.f32 %v633, %v1019
    %v1021 = vand.u32 %v1020, 4294901760
    %1022 = vmatpush1.msra.mxu0 %v1021
    %1023 = vmatprep.subr.mxu0 0.0
    %1024 = vmatpush2.msra.mxu0 0.0
    %1025 = vmatprep.subr.mxu0 0.0
    %1026 = vmatpush2.msra.mxu0 0.0
    %1027 = vmatprep.subr.mxu0 0.0
    %1028 = vmatpush2.msra.mxu0 0.0
    %1029 = vmatprep.subr.mxu0 0.0
    %1030 = vmatpush2.msra.mxu0 0.0
    %1031 = vmatprep.subr.mxu0 0.0
    %1032 = vmatpush2.msra.mxu0 0.0
    %1033 = vmatprep.subr.mxu0 0.0
    %1034 = vmatpush2.msra.mxu0 0.0
    %1035 = vmatprep.subr.mxu0 0.0
    %1036 = vmatpush2.msra.mxu0 0.0
    %1037 = vmatprep.subr.mxu0 0.0
    %1038 = vmatpush2.msra.mxu0 0.0
    %1039 = vmatprep.subr.mxu0 0.0
    %1040 = vmatpush2.msra.mxu0 0.0
    %1041 = vmatprep.subr.mxu0 0.0
    %1042 = vmatpush2.msra.mxu0 0.0
    %1043 = vmatprep.subr.mxu0 0.0
    %1044 = vmatpush2.msra.mxu0 0.0
    %1045 = vmatprep.subr.mxu0 0.0
    %1046 = vmatpush2.msra.mxu0 0.0
    %1047 = vmatprep.subr.mxu0 0.0
    %1048 = vmatpush2.msra.mxu0 0.0
    %1049 = vmatprep.subr.mxu0 0.0
    %1050 = vmatpush2.msra.mxu0 0.0
    %1051 = vmatprep.subr.mxu0 0.0
    %1052 = vmatpush2.msra.mxu0 0.0
    %1053 = vmatprep.subr.mxu0 0.0
    %1054 = vmatpush2.msra.mxu0 0.0
    %1055 = vmatprep.mubr.f32.mxu0 0.0
    %v1056 = vand.u32 %v650, 4294901760
    %1057 = vmatmul.mubr.f32.gmra.mxu0 %v1056
    %v1058 = vpop.f32.mrf.mxu0
    %v1059 = vadd.f32 %v976, %v1058
    %v1060 = vpop.f32.mrf.mxu0
    %1061 = vdwg.mxu0
    %1062 = vmatprep.subr.mxu0 0.0
    %1063 = vmatpush1.msra.mxu0 0.0
    %1064 = vmatprep.subr.mxu0 0.0
    %1065 = vmatpush1.msra.mxu0 0.0
    %1066 = vmatprep.subr.mxu0 0.0
    %1067 = vmatpush1.msra.mxu0 0.0
    %1068 = vmatprep.subr.mxu0 0.0
    %1069 = vmatpush1.msra.mxu0 0.0
    %1070 = vmatprep.subr.mxu0 0.0
    %1071 = vmatpush1.msra.mxu0 0.0
    %1072 = vmatprep.subr.mxu0 0.0
    %1073 = vmatpush1.msra.mxu0 0.0
    %1074 = vmatprep.subr.mxu0 0.0
    %1075 = vmatpush1.msra.mxu0 0.0
    %1076 = vmatprep.subr.mxu0 0.0
    %1077 = vmatpush1.msra.mxu0 0.0
    %1078 = vmatprep.subr.mxu0 0.0
    %1079 = vmatpush1.msra.mxu0 0.0
    %1080 = vmatprep.subr.mxu0 0.0
    %1081 = vmatpush1.msra.mxu0 0.0
    %1082 = vmatprep.subr.mxu0 0.0
    %1083 = vmatpush1.msra.mxu0 0.0
    %1084 = vmatprep.subr.mxu0 0.0
    %1085 = vmatpush1.msra.mxu0 0.0
    %1086 = vmatprep.subr.mxu0 0.0
    %v1087 = vand.u32 %v636, 4294901760
    %1088 = vmatpush1.msra.mxu0 %v1087
    %1089 = vmatprep.subr.mxu0 0.0
    %v1090 = vand.u32 %v635, 4294901760
    %1091 = vmatpush1.msra.mxu0 %v1090
    %1092 = vmatprep.subr.mxu0 0.0
    %v1093 = vand.u32 %v634, 4294901760
    %1094 = vmatpush1.msra.mxu0 %v1093
    %1095 = vmatprep.subr.mxu0 0.0
    %v1096 = vand.u32 %v633, 4294901760
    %1097 = vmatpush1.msra.mxu0 %v1096
    %1098 = vmatprep.subr.mxu0 0.0
    %1099 = vmatpush2.msra.mxu0 0.0
    %1100 = vmatprep.subr.mxu0 0.0
    %1101 = vmatpush2.msra.mxu0 0.0
    %1102 = vmatprep.subr.mxu0 0.0
    %1103 = vmatpush2.msra.mxu0 0.0
    %1104 = vmatprep.subr.mxu0 0.0
    %1105 = vmatpush2.msra.mxu0 0.0
    %1106 = vmatprep.subr.mxu0 0.0
    %1107 = vmatpush2.msra.mxu0 0.0
    %1108 = vmatprep.subr.mxu0 0.0
    %1109 = vmatpush2.msra.mxu0 0.0
    %1110 = vmatprep.subr.mxu0 0.0
    %1111 = vmatpush2.msra.mxu0 0.0
    %1112 = vmatprep.subr.mxu0 0.0
    %1113 = vmatpush2.msra.mxu0 0.0
    %1114 = vmatprep.subr.mxu0 0.0
    %1115 = vmatpush2.msra.mxu0 0.0
    %1116 = vmatprep.subr.mxu0 0.0
    %1117 = vmatpush2.msra.mxu0 0.0
    %1118 = vmatprep.subr.mxu0 0.0
    %1119 = vmatpush2.msra.mxu0 0.0
    %1120 = vmatprep.subr.mxu0 0.0
    %1121 = vmatpush2.msra.mxu0 0.0
    %1122 = vmatprep.subr.mxu0 0.0
    %1123 = vmatpush2.msra.mxu0 0.0
    %1124 = vmatprep.subr.mxu0 0.0
    %1125 = vmatpush2.msra.mxu0 0.0
    %1126 = vmatprep.subr.mxu0 0.0
    %1127 = vmatpush2.msra.mxu0 0.0
    %1128 = vmatprep.subr.mxu0 0.0
    %1129 = vmatpush2.msra.mxu0 0.0
    %1130 = vmatprep.mubr.f32.mxu0 0.0
    %v1131 = vand.u32 %v650, 4294901760
    %1132 = vmatmul.mubr.f32.gmra.mxu0 %v1131
    %v1133 = vpop.f32.mrf.mxu0
    %v1134 = vadd.f32 %v1059, %v1133
    %v1135 = vpop.f32.mrf.mxu0
    %1136 = vdwg.mxu0
    %1137 = vst [vmem:[#allocation3] sm:$0x1] %v1134
    // Predicated region
    $region18: #{tpu_custom_call.1} parent=1 // pred_check
      _
    $region19: #{tpu_custom_call.1} parent=1 // pred_check_branch
      %1139 = sbr.rel (0) target = $region21
    $region20: #{tpu_custom_call.1} parent=1 // pred_region
      %s1141 = ssub.s32 16, 16
      %1142 = vsyncadd [#allocation4], %s1141
      %s1144 = sshll.u32 [#allocation3], 4
      %s1145 = int_to_ptr.vmem [resolvable:$true] %s1144
      %1147 = dma.vmem_to_hbm [thread:$0]  %s1145, 16, %s4, [#allocation4]
    $region21: #{tpu_custom_call.1} parent=1 // pred_fallthru
      _
    // Predicated region
    $region22: #{tpu_custom_call.1} parent=1 // pred_check
      _
    $region23: #{tpu_custom_call.1} parent=1 // pred_check_branch
      %1149 = sbr.rel (0) target = $region25
    $region24: #{tpu_custom_call.1} parent=1 // pred_region
      %1150 = dma.done [#allocation4], 16
    $region25: #{tpu_custom_call.1} parent=1 // pred_fallthru
      _
    %1151 = vsyncpa [#allocation4], 1

</llo_original>
